<compile_context>
chip_gen: v5e
topology: v5e:2x2
jax: 0.10.0
libtpu: 0.0.40
codegen_flags: <defaults>
</compile_context>

<pallas_src>
import functools

import jax
import jax.numpy as jnp
from jax.experimental import pallas as pl
from jax.experimental.pallas import tpu as pltpu


def mlp_kernel(x_ref, w1_ref, b1_ref, w2_ref, b2_ref, o_ref, *, n_rows, mask_tail):
    # --- Linear(224 -> 3) on the MXU (+ bias, ReLU), f32 accumulation ---
    h = jnp.dot(x_ref[...], w1_ref[...], preferred_element_type=jnp.float32)
    h = h + b1_ref[...]                       # broadcast (1, 3)
    h = jnp.maximum(h, 0.0)
    # dropout1: identity (eval mode)

    # --- Linear(3 -> 10): tiny second matmul on the (idle) MXU ---
    y = jnp.dot(h, w2_ref[...], preferred_element_type=jnp.float32)
    y = y + b2_ref[...]                       # broadcast (1, 10)
    y = jnp.maximum(y, 0.0)
    # dropout2: identity (eval mode)

    if mask_tail:
        # Last grid step may cover rows past B (input is NOT padded in the
        # wrapper). Zero those rows so exp()/log() of stale VMEM can't produce
        # NaN/Inf; the HBM store of those rows is clipped anyway.
        tb = y.shape[0]
        row = (jax.lax.broadcasted_iota(jnp.int32, (tb, 1), 0)
               + pl.program_id(0) * tb)
        y = jnp.where(row < n_rows, y, 0.0)

    # --- log_softmax over dim=1 (numerically stable) ---
    m = jnp.max(y, axis=1, keepdims=True)
    s = y - m
    lse = jnp.log(jnp.sum(jnp.exp(s), axis=1, keepdims=True))
    o_ref[...] = s - lse


def model_forward(x, w1, b1, w2, b2, *, max_block_b=2048):
    B, D_in = x.shape
    H = w1.shape[1]
    D_out = w2.shape[1]

    # Tile selection: one big tile for B <= 2048 (block equal to full array
    # dims is always legal, even for tiny B like 1 or 2); 2048-row tiles
    # otherwise (multiple of the 8-sublane quantum, VMEM-safe on v5e/v6e/v7x).
    tb = B if B <= max_block_b else max_block_b
    grid = pl.cdiv(B, tb)
    mask_tail = (B % tb) != 0

    kernel = functools.partial(mlp_kernel, n_rows=B, mask_tail=mask_tail)
    return pl.pallas_call(
        kernel,
        out_shape=jax.ShapeDtypeStruct((B, D_out), jnp.float32),
        grid=(grid,),
        in_specs=[
            pl.BlockSpec((tb, D_in), lambda i: (i, 0)),      # x: tiled over batch
            pl.BlockSpec((D_in, H), lambda i: (0, 0)),       # w1: replicated
            pl.BlockSpec((1, H), lambda i: (0, 0)),          # b1: replicated
            pl.BlockSpec((H, D_out), lambda i: (0, 0)),      # w2: replicated
            pl.BlockSpec((1, D_out), lambda i: (0, 0)),      # b2: replicated
        ],
        out_specs=pl.BlockSpec((tb, D_out), lambda i: (i, 0)),
        compiler_params=pltpu.CompilerParams(
            dimension_semantics=("parallel",),               # megacore on v7x
        ),
    )(x, w1, b1, w2, b2)


def init_params(key):
    # nn.Linear default init: U(-1/sqrt(fan_in), 1/sqrt(fan_in))
    k1, k2, k3, k4 = jax.random.split(key, 4)
    lim1 = 1.0 / jnp.sqrt(224.0)
    lim2 = 1.0 / jnp.sqrt(3.0)
    w1 = jax.random.uniform(k1, (224, 3), jnp.float32, -lim1, lim1)
    b1 = jax.random.uniform(k2, (1, 3), jnp.float32, -lim1, lim1)
    w2 = jax.random.uniform(k3, (3, 10), jnp.float32, -lim2, lim2)
    b2 = jax.random.uniform(k4, (1, 10), jnp.float32, -lim2, lim2)
    return w1, b1, w2, b2


if __name__ == "__main__":
    key = jax.random.PRNGKey(0)
    kx, kp = jax.random.split(key)
    w1, b1, w2, b2 = init_params(kp)

    def ref_fwd(xx):
        h = jnp.maximum(xx @ w1 + b1, 0.0)
        y = jnp.maximum(h @ w2 + b2, 0.0)
        return jax.nn.log_softmax(y, axis=1)

    # Spec shape: (1, 224).
    x1 = jax.random.normal(kx, (1, 224), jnp.float32)
    out1 = model_forward(x1, w1, b1, w2, b2)
    jax.block_until_ready(out1)
    assert out1.shape == (1, 10)
    assert jnp.allclose(out1, ref_fwd(x1), atol=1e-4), "batch=1 mismatch"

    # Small batch (single full-array tile, grid=1).
    x_small = jax.random.normal(kx, (2, 224), jnp.float32)
    out_small = model_forward(x_small, w1, b1, w2, b2)
    jax.block_until_ready(out_small)
    assert out_small.shape == (2, 10)
    assert jnp.allclose(out_small, ref_fwd(x_small), atol=1e-4), "small-batch mismatch"

    # Ragged large batch: grid=3 (2048+2048+4), exercises the unpadded partial
    # last block + in-kernel tail masking + parallel grid axis.
    x_big = jax.random.normal(kx, (4100, 224), jnp.float32)
    out_big = model_forward(x_big, w1, b1, w2, b2)
    jax.block_until_ready(out_big)
    assert out_big.shape == (4100, 10)
    assert jnp.all(jnp.isfinite(out_big))
    assert jnp.allclose(out_big, ref_fwd(x_big), atol=1e-4), "big-batch mismatch"

    print("KERNEL_OK")
</pallas_src>

<mosaic_0001>
module attributes {stable_mosaic.version = 11 : i64} {
  func.func @mlp_kernel(%arg0: i32, %arg1: memref<1x224xf32, #tpu.memory_space<vmem>>, %arg2: memref<224x3xf32, #tpu.memory_space<vmem>>, %arg3: memref<1x3xf32, #tpu.memory_space<vmem>>, %arg4: memref<3x10xf32, #tpu.memory_space<vmem>>, %arg5: memref<1x10xf32, #tpu.memory_space<vmem>>, %arg6: memref<1x10xf32, #tpu.memory_space<vmem>>) attributes {dimension_semantics = [#tpu.dimension_semantics<parallel>], iteration_bounds = array<i64: 1>, scalar_prefetch = 0 : i64, scratch_operands = 0 : i64, tpu.core_type = #tpu.core_type<tc>, window_params = [{transform_indices = @transform_0, window_bounds = array<i64: 1, 224>}, {pipeline_mode = #tpu.pipeline_mode<synchronous>, transform_indices = @transform_1, window_bounds = array<i64: 224, 3>}, {pipeline_mode = #tpu.pipeline_mode<synchronous>, transform_indices = @transform_2, window_bounds = array<i64: 1, 3>}, {pipeline_mode = #tpu.pipeline_mode<synchronous>, transform_indices = @transform_3, window_bounds = array<i64: 3, 10>}, {pipeline_mode = #tpu.pipeline_mode<synchronous>, transform_indices = @transform_4, window_bounds = array<i64: 1, 10>}, {transform_indices = @transform_5, window_bounds = array<i64: 1, 10>}]} {
    %c0 = arith.constant 0 : index
    %c0_0 = arith.constant 0 : index
    %0 = vector.load %arg1[%c0, %c0_0] : memref<1x224xf32, #tpu.memory_space<vmem>>, vector<1x224xf32>
    %c0_1 = arith.constant 0 : index
    %c0_2 = arith.constant 0 : index
    %1 = vector.load %arg2[%c0_1, %c0_2] : memref<224x3xf32, #tpu.memory_space<vmem>>, vector<224x3xf32>
    %cst = arith.constant dense<0.000000e+00> : vector<1x3xf32>
    %2 = tpu.matmul %0, %1, %cst {dimension_numbers = #tpu.dot_dimension_numbers<[1], [0], [0], [1], [0, 0, 1, 1], [], []>} : vector<1x224xf32>, vector<224x3xf32>, vector<1x3xf32> -> vector<1x3xf32>
    %c0_3 = arith.constant 0 : index
    %c0_4 = arith.constant 0 : index
    %3 = vector.load %arg3[%c0_3, %c0_4] : memref<1x3xf32, #tpu.memory_space<vmem>>, vector<1x3xf32>
    %4 = arith.addf %2, %3 : vector<1x3xf32>
    %cst_5 = arith.constant 0.000000e+00 : f32
    %5 = vector.broadcast %cst_5 : f32 to vector<1x3xf32>
    %6 = arith.maximumf %4, %5 : vector<1x3xf32>
    %c0_6 = arith.constant 0 : index
    %c0_7 = arith.constant 0 : index
    %7 = vector.load %arg4[%c0_6, %c0_7] : memref<3x10xf32, #tpu.memory_space<vmem>>, vector<3x10xf32>
    %cst_8 = arith.constant dense<0.000000e+00> : vector<1x10xf32>
    %8 = tpu.matmul %6, %7, %cst_8 {dimension_numbers = #tpu.dot_dimension_numbers<[1], [0], [0], [1], [0, 0, 1, 1], [], []>} : vector<1x3xf32>, vector<3x10xf32>, vector<1x10xf32> -> vector<1x10xf32>
    %c0_9 = arith.constant 0 : index
    %c0_10 = arith.constant 0 : index
    %9 = vector.load %arg5[%c0_9, %c0_10] : memref<1x10xf32, #tpu.memory_space<vmem>>, vector<1x10xf32>
    %10 = arith.addf %8, %9 : vector<1x10xf32>
    %cst_11 = arith.constant 0.000000e+00 : f32
    %11 = vector.broadcast %cst_11 : f32 to vector<1x10xf32>
    %12 = arith.maximumf %10, %11 : vector<1x10xf32>
    %cst_12 = arith.constant dense<0xFF800000> : vector<1xf32>
    %13 = vector.multi_reduction <maximumf>, %12, %cst_12 [1] : vector<1x10xf32> to vector<1xf32>
    %14 = vector.shape_cast %13 : vector<1xf32> to vector<1x1xf32>
    %15 = vector.broadcast %14 : vector<1x1xf32> to vector<1x10xf32>
    %16 = arith.subf %12, %15 : vector<1x10xf32>
    %17 = math.exp %16 : vector<1x10xf32>
    %cst_13 = arith.constant dense<0.000000e+00> : vector<1xf32>
    %18 = vector.multi_reduction <add>, %17, %cst_13 [1] : vector<1x10xf32> to vector<1xf32>
    %19 = vector.shape_cast %18 : vector<1xf32> to vector<1x1xf32>
    %20 = math.log %19 : vector<1x1xf32>
    %21 = vector.broadcast %20 : vector<1x1xf32> to vector<1x10xf32>
    %22 = arith.subf %16, %21 : vector<1x10xf32>
    %c0_14 = arith.constant 0 : index
    %c0_15 = arith.constant 0 : index
    %23 = vector.load %arg6[%c0_14, %c0_15] : memref<1x10xf32, #tpu.memory_space<vmem>>, vector<1x10xf32>
    tpu.vector_store %arg6[%c0_14, %c0_15], %22 {strides = array<i32>} : memref<1x10xf32, #tpu.memory_space<vmem>>, vector<1x10xf32>,
    return
  }
  func.func @transform_0(%arg0: i32) -> (i32, i32) {
    %c0_i32 = arith.constant 0 : i32
    %c0_i32_0 = arith.constant 0 : i32
    return %arg0, %c0_i32 : i32, i32
  }
  func.func @transform_1(%arg0: i32) -> (i32, i32) {
    %c0_i32 = arith.constant 0 : i32
    %c0_i32_0 = arith.constant 0 : i32
    %c0_i32_1 = arith.constant 0 : i32
    return %c0_i32, %c0_i32_0 : i32, i32
  }
  func.func @transform_2(%arg0: i32) -> (i32, i32) {
    %c0_i32 = arith.constant 0 : i32
    %c0_i32_0 = arith.constant 0 : i32
    %c0_i32_1 = arith.constant 0 : i32
    return %c0_i32, %c0_i32_0 : i32, i32
  }
  func.func @transform_3(%arg0: i32) -> (i32, i32) {
    %c0_i32 = arith.constant 0 : i32
    %c0_i32_0 = arith.constant 0 : i32
    %c0_i32_1 = arith.constant 0 : i32
    return %c0_i32, %c0_i32_0 : i32, i32
  }
  func.func @transform_4(%arg0: i32) -> (i32, i32) {
    %c0_i32 = arith.constant 0 : i32
    %c0_i32_0 = arith.constant 0 : i32
    %c0_i32_1 = arith.constant 0 : i32
    return %c0_i32, %c0_i32_0 : i32, i32
  }
  func.func @transform_5(%arg0: i32) -> (i32, i32) {
    %c0_i32 = arith.constant 0 : i32
    %c0_i32_0 = arith.constant 0 : i32
    return %arg0, %c0_i32 : i32, i32
  }
}

</mosaic_0001>

<llo_original>
// kernel: tpu_custom_call.1
$region0: #{tpu_custom_call.1}
  #allocation0 [shape = 'u32[]', space=smem, size = 0x4, offset = 0x4, fixed_abs, tag = 'smem constant byte address 0x4 - core index']
  #allocation1 [shape = 'u32[72,128]{1,0:T(1,128)}', space=vmem, size = 0x9000, scoped, tag = 'internal scratch']
  %s0 = inlined_call_operand.vmem [shape: f32[1,224], index: 0, kind: input, shape index: {}]
  %s1 = inlined_call_operand.vmem [shape: f32[224,3], index: 1, kind: input, shape index: {}]
  %s2 = inlined_call_operand.vmem [shape: f32[1,3], index: 2, kind: input, shape index: {}]
  %s3 = inlined_call_operand.vmem [shape: f32[3,10], index: 3, kind: input, shape index: {}]
  %s4 = inlined_call_operand.vmem [shape: f32[1,10], index: 4, kind: input, shape index: {}]
  %s5 = inlined_call_operand.hbm [shape: f32[1,10], index: 5, kind: output, shape index: {}]
  %s6 = sld [smem:[#allocation0]]
  $region30: #{tpu_custom_call.1} parent=0
    _
  %s8 = ssub.s32 1, %s6
  %s9 = scalar_select 0, %s8, %s6
  $region1: #{tpu_custom_call.1} parent=0
    #allocation2 [shape = 'u8[512]{0}', space=vmem, size = 0x400, scoped, tag = 'output window, operand 0, single buffered']
    #allocation3 [shape = 's32[1]{0}', space=sflag, size = 0x4, scoped, tag = 'scoped memory for tpu_custom_call.1']
    %10 = vsyncpa [#allocation3], 0
    // Predicated region
    $region2: #{tpu_custom_call.1} parent=1 // pred_check
      _
    $region3: #{tpu_custom_call.1} parent=1 // pred_check_branch
      %12 = sbr.rel (0) target = $region5
    $region4: #{tpu_custom_call.1} parent=1 // pred_region
      _
    $region5: #{tpu_custom_call.1} parent=1 // pred_fallthru
      _
    // Predicated region
    $region6: #{tpu_custom_call.1} parent=1 // pred_check
      _
    $region7: #{tpu_custom_call.1} parent=1 // pred_check_branch
      %14 = sbr.rel (0) target = $region9
    $region8: #{tpu_custom_call.1} parent=1 // pred_region
      _
    $region9: #{tpu_custom_call.1} parent=1 // pred_fallthru
      _
    // Predicated region
    $region10: #{tpu_custom_call.1} parent=1 // pred_check
      _
    $region11: #{tpu_custom_call.1} parent=1 // pred_check_branch
      %16 = sbr.rel (0) target = $region13
    $region12: #{tpu_custom_call.1} parent=1 // pred_region
      _
    $region13: #{tpu_custom_call.1} parent=1 // pred_fallthru
      _
    // Predicated region
    $region14: #{tpu_custom_call.1} parent=1 // pred_check
      _
    $region15: #{tpu_custom_call.1} parent=1 // pred_check_branch
      %18 = sbr.rel (0) target = $region17
    $region16: #{tpu_custom_call.1} parent=1 // pred_region
      _
    $region17: #{tpu_custom_call.1} parent=1 // pred_fallthru
      _
    // Predicated region
    $region18: #{tpu_custom_call.1} parent=1 // pred_check
      _
    $region19: #{tpu_custom_call.1} parent=1 // pred_check_branch
      %20 = sbr.rel (0) target = $region21
    $region20: #{tpu_custom_call.1} parent=1 // pred_region
      _
    $region21: #{tpu_custom_call.1} parent=1 // pred_fallthru
      _
    %v21 = vld [vmem:[%s0] sm:$0x3]
    %v22 = vld [vmem:[%s1] sm:$0xff]
    %v23 = vld [vmem:[%s1 + $0x8] sm:$0xff]
    %v24 = vld [vmem:[%s1 + $0x10] sm:$0xff]
    %v25 = vld [vmem:[%s1 + $0x18] sm:$0xff]
    %v26 = vld [vmem:[%s1 + $0x20] sm:$0xff]
    %v27 = vld [vmem:[%s1 + $0x28] sm:$0xff]
    %v28 = vld [vmem:[%s1 + $0x30] sm:$0xff]
    %v29 = vld [vmem:[%s1 + $0x38] sm:$0xff]
    %v30 = vld [vmem:[%s1 + $0x40] sm:$0xff]
    %v31 = vld [vmem:[%s1 + $0x48] sm:$0xff]
    %v32 = vld [vmem:[%s1 + $0x50] sm:$0xff]
    %v33 = vld [vmem:[%s1 + $0x58] sm:$0xff]
    %v34 = vld [vmem:[%s1 + $0x60] sm:$0xff]
    %v35 = vld [vmem:[%s1 + $0x68] sm:$0xff]
    %v36 = vld [vmem:[%s1 + $0x70] sm:$0xff]
    %v37 = vld [vmem:[%s1 + $0x78] sm:$0xff]
    %v38 = vld [vmem:[%s1 + $0x80] sm:$0xff]
    %v39 = vld [vmem:[%s1 + $0x88] sm:$0xff]
    %v40 = vld [vmem:[%s1 + $0x90] sm:$0xff]
    %v41 = vld [vmem:[%s1 + $0x98] sm:$0xff]
    %v42 = vld [vmem:[%s1 + $0xa0] sm:$0xff]
    %v43 = vld [vmem:[%s1 + $0xa8] sm:$0xff]
    %v44 = vld [vmem:[%s1 + $0xb0] sm:$0xff]
    %v45 = vld [vmem:[%s1 + $0xb8] sm:$0xff]
    %v46 = vld [vmem:[%s1 + $0xc0] sm:$0xff]
    %v47 = vld [vmem:[%s1 + $0xc8] sm:$0xff]
    %v48 = vld [vmem:[%s1 + $0xd0] sm:$0xff]
    %v49 = vld [vmem:[%s1 + $0xd8] sm:$0xff]
    %v50 = vld [vmem:[%s2] sm:$0x1]
    %v52 = vperm.slane %v21, 0
    %v53 = vperm.slane %v21, 1
    %vm55 = vcmask 785408
    %v56 = vsel %vm55, %v53, 0
    %58 = vmatpush.msra.mxu0 %v37
    %59 = vmatpush.msra.mxu0 %v36
    %60 = vmatpush.msra.mxu0 %v35
    %61 = vmatpush.msra.mxu0 %v34
    %62 = vmatpush.msra.mxu0 %v33
    %63 = vmatpush.msra.mxu0 %v32
    %64 = vmatpush.msra.mxu0 %v31
    %65 = vmatpush.msra.mxu0 %v30
    %66 = vmatpush.msra.mxu0 %v29
    %67 = vmatpush.msra.mxu0 %v28
    %68 = vmatpush.msra.mxu0 %v27
    %69 = vmatpush.msra.mxu0 %v26
    %70 = vmatpush.msra.mxu0 %v25
    %71 = vmatpush.msra.mxu0 %v24
    %72 = vmatpush.msra.mxu0 %v23
    %73 = vmatpush.msra.mxu0 %v22
    %74 = vmatmul.f32.gmra.mxu0 %v52
    %v75 = vpop.f32.mrf.mxu0
    %v76 = vadd.f32 %v50, %v75
    %77 = vdwg.mxu0
    %78 = vmatpush.msra.mxu0 0.0
    %79 = vmatpush.msra.mxu0 0.0
    %80 = vmatpush.msra.mxu0 0.0
    %81 = vmatpush.msra.mxu0 0.0
    %82 = vmatpush.msra.mxu0 %v49
    %83 = vmatpush.msra.mxu0 %v48
    %84 = vmatpush.msra.mxu0 %v47
    %85 = vmatpush.msra.mxu0 %v46
    %86 = vmatpush.msra.mxu0 %v45
    %87 = vmatpush.msra.mxu0 %v44
    %88 = vmatpush.msra.mxu0 %v43
    %89 = vmatpush.msra.mxu0 %v42
    %90 = vmatpush.msra.mxu0 %v41
    %91 = vmatpush.msra.mxu0 %v40
    %92 = vmatpush.msra.mxu0 %v39
    %93 = vmatpush.msra.mxu0 %v38
    %94 = vmatmul.f32.gmra.mxu0 %v56
    %v95 = vpop.f32.mrf.mxu0
    %v96 = vadd.f32 %v76, %v95
    %97 = vdwg.mxu0
    %v98 = vmax.f32 %v96, 0.0
    %v99 = vld [vmem:[%s3] sm:$0x7]
    %v100 = vld [vmem:[%s4] sm:$0x1]
    %vm101 = vcmask 23552
    %v103 = vsel %vm101, %v98, 0
    %vm105 = vcmask 1042432
    %v107 = vsel %vm105, %v99, 0
    %109 = vmatpush.msra.mxu0 0.0
    %110 = vmatpush.msra.mxu0 0.0
    %111 = vmatpush.msra.mxu0 0.0
    %112 = vmatpush.msra.mxu0 0.0
    %113 = vmatpush.msra.mxu0 0.0
    %114 = vmatpush.msra.mxu0 0.0
    %115 = vmatpush.msra.mxu0 0.0
    %116 = vmatpush.msra.mxu0 0.0
    %117 = vmatpush.msra.mxu0 0.0
    %118 = vmatpush.msra.mxu0 0.0
    %119 = vmatpush.msra.mxu0 0.0
    %120 = vmatpush.msra.mxu0 0.0
    %121 = vmatpush.msra.mxu0 0.0
    %122 = vmatpush.msra.mxu0 0.0
    %123 = vmatpush.msra.mxu0 0.0
    %124 = vmatpush.msra.mxu0 %v107
    %125 = vmatmul.f32.gmra.mxu0 %v103
    %v126 = vpop.f32.mrf.mxu0
    %v127 = vadd.f32 %v100, %v126
    %128 = vdwg.mxu0
    %v129 = vmax.f32 %v127, 0.0
    %vm130 = vcmask 73728
    %v131 = vsel %vm130, %v129, -inf
    %132 = vmax.xlane.f32.xlu0 %v131
    %v133 = vpop.xlane.xlu0 %132
    %v134 = vsub.f32 %v129, %v133
    %v135 = vmul.f32 %v134, 1.442695
    %v136 = vpow.pop %v135
    %v137 = vsel %vm130, %v136, 0.0
    %138 = vadd.xlane.f32.xlu0 %v137
    %v139 = vpop.xlane.xlu0 %138
    %v140 = vlog2.pop %v139
    %v141 = vmul.f32 %v140, 0.6931472
    %v142 = vsub.f32 %v134, %v141
    %143 = vst.msk [vmem:[#allocation2] sm:$0x1] %vm130, %v142
    // Predicated region
    $region22: #{tpu_custom_call.1} parent=1 // pred_check
      _
    $region23: #{tpu_custom_call.1} parent=1 // pred_check_branch
      %145 = sbr.rel (0) target = $region25
    $region24: #{tpu_custom_call.1} parent=1 // pred_region
      %147 = vsyncadd [#allocation3], 0
      %s149 = sshll.u32 [#allocation2], 4
      %s150 = int_to_ptr.vmem [resolvable:$true] %s149
      %s151 = sshll.u32 %s5, 4
      %s152 = int_to_ptr.hbm [resolvable:$true] %s151
      %154 = dma.vmem_to_hbm [thread:$0]  %s150, 16, %s152, [#allocation3]
    $region25: #{tpu_custom_call.1} parent=1 // pred_fallthru
      _
    // Predicated region
    $region26: #{tpu_custom_call.1} parent=1 // pred_check
      _
    $region27: #{tpu_custom_call.1} parent=1 // pred_check_branch
      %156 = sbr.rel (0) target = $region29
    $region28: #{tpu_custom_call.1} parent=1 // pred_region
      %158 = dma.done [#allocation3], 16
    $region29: #{tpu_custom_call.1} parent=1 // pred_fallthru
      _
    %159 = vsyncpa [#allocation3], 1

</llo_original>
